<compile_context>
chip_gen: v6e
topology: v6e:2x2x1
jax: 0.10.0
libtpu: 0.0.40
codegen_flags: <defaults>
</compile_context>

<pallas_src>
import functools

import jax
import jax.numpy as jnp
from jax import lax
from jax.experimental import pallas as pl
from jax.experimental.pallas import tpu as pltpu


def _convbnrelu_kernel(x_ref, w_ref, b_ref, o_ref):
    # x_ref: (1, Hp, Wp*Cin)     padded, channel-packed input slab (one batch elem)
    # w_ref: (K, Wp*Cin, W*Cout) Toeplitz-packed weights with BN scale folded in
    # b_ref: (1, W*Cout)         lane-dense folded BN bias
    # o_ref: (1, H, W*Cout)      lane-dense output
    _, H, WC = o_ref.shape
    K = w_ref.shape[0]

    # Lane-dense f32 accumulator: (H, W*Cout) = (16, 128) -> 2 vregs.
    acc = jnp.zeros((H, WC), jnp.float32)
    for kh in range(K):  # static unroll: K=3 lane-dense MXU matmuls
        acc = acc + jnp.dot(
            x_ref[0, kh:kh + H, :],           # (H, Wp*Cin) sublane slice
            w_ref[kh],                        # (Wp*Cin, W*Cout)
            preferred_element_type=jnp.float32,
        )

    # Folded BatchNorm bias + ReLU in f32, then one unmasked lane-dense store.
    y = jnp.maximum(acc + b_ref[...], 0.0)
    o_ref[...] = y[None, :, :].astype(o_ref.dtype)


@functools.partial(jax.jit, static_argnames=("k", "pad"))
def convbnrelu_pallas(x_nchw, w_oihw, bn_scale, bn_bias, *, k=3, pad=1):
    """x_nchw: (N, Cin, H, W). Returns (N, Cout, H, W) = relu(bn(conv(x)))."""
    N, Cin, H, W = x_nchw.shape
    Cout = w_oihw.shape[0]
    Hp, Wp = H + 2 * pad, W + 2 * pad

    # NCHW -> NHWC, pad spatial dims, merge (W, Cin) onto the lane axis.
    x_nhwc = jnp.transpose(x_nchw, (0, 2, 3, 1)).astype(jnp.float32)
    x_pad = jnp.pad(x_nhwc, ((0, 0), (pad, pad), (pad, pad), (0, 0)))
    x_packed = x_pad.reshape(N, Hp, Wp * Cin)

    # OIHW -> HWIO; fold BN scale into the weights (one-time O(K*K*Cin*Cout)).
    w_hwio = jnp.transpose(w_oihw, (2, 3, 1, 0)).astype(jnp.float32)
    w_scaled = w_hwio * bn_scale.astype(jnp.float32)[None, None, None, :]

    # Per-kh Toeplitz weight matrix so a whole output row is one matmul:
    #   wmat[kh, wp*Cin + ci, w*Cout + co] = w_scaled[kh, wp - w, ci, co]
    #                                        if 0 <= wp - w < k else 0
    wp_idx = jnp.arange(Wp)[:, None]          # (Wp, 1)
    w_idx = jnp.arange(W)[None, :]            # (1, W)
    kw = wp_idx - w_idx                       # (Wp, W)
    valid = (kw >= 0) & (kw < k)
    kw_c = jnp.clip(kw, 0, k - 1)
    wmat = w_scaled[:, kw_c, :, :]                           # (K, Wp, W, Cin, Cout)
    wmat = jnp.where(valid[None, :, :, None, None], wmat, 0.0)
    wmat = jnp.transpose(wmat, (0, 1, 3, 2, 4))              # (K, Wp, Cin, W, Cout)
    wmat = wmat.reshape(k, Wp * Cin, W * Cout)

    # Lane-dense folded BN bias: bias_dense[w*Cout + co] = bn_bias[co].
    bias_dense = jnp.tile(bn_bias.astype(jnp.float32), W).reshape(1, W * Cout)

    out_dense = pl.pallas_call(
        _convbnrelu_kernel,
        out_shape=jax.ShapeDtypeStruct((N, H, W * Cout), jnp.float32),
        grid_spec=pltpu.PrefetchScalarGridSpec(
            num_scalar_prefetch=0,
            grid=(N,),  # N parallel steps -> shards across TCs (e.g. v7x 2 TCs)
            in_specs=[
                pl.BlockSpec((1, Hp, Wp * Cin), lambda n: (n, 0, 0)),
                pl.BlockSpec((k, Wp * Cin, W * Cout), lambda n: (0, 0, 0)),
                pl.BlockSpec((1, W * Cout), lambda n: (0, 0)),
            ],
            out_specs=pl.BlockSpec((1, H, W * Cout), lambda n: (n, 0, 0)),
        ),
        compiler_params=pltpu.CompilerParams(
            dimension_semantics=("parallel",),
        ),
    )(x_packed, wmat, bias_dense)

    out = out_dense.reshape(N, H, W, Cout)
    return jnp.transpose(out, (0, 3, 1, 2)).astype(x_nchw.dtype)


def _reference(x_nchw, w_oihw, bn_scale, bn_bias):
    y = lax.conv_general_dilated(
        x_nchw, w_oihw,
        window_strides=(1, 1), padding=((1, 1), (1, 1)),
        dimension_numbers=("NCHW", "OIHW", "NCHW"),
    )
    y = y * bn_scale[None, :, None, None] + bn_bias[None, :, None, None]
    return jnp.maximum(y, 0.0)


if __name__ == "__main__":
    # Module config: convbnrelu(in_channel=4, out_channel=8) with defaults
    # k=3, s=1, p=1, g=1, d=1, bias=False, bn=True, relu=True.
    N, Cin, H, W = 2, 4, 16, 16
    Cout, K = 8, 3

    key = jax.random.PRNGKey(0)
    kx, kw, kg, kb = jax.random.split(key, 4)

    x = jax.random.normal(kx, (N, Cin, H, W), jnp.float32)
    conv_w = jax.random.normal(kw, (Cout, Cin, K, K), jnp.float32) * 0.1

    # BatchNorm2d (inference mode): affine params + running stats folded to scale/bias.
    gamma = 1.0 + 0.1 * jax.random.normal(kg, (Cout,), jnp.float32)
    beta = 0.1 * jax.random.normal(kb, (Cout,), jnp.float32)
    run_mean = jnp.zeros((Cout,), jnp.float32)
    run_var = jnp.ones((Cout,), jnp.float32)
    eps = 1e-5
    bn_scale = gamma / jnp.sqrt(run_var + eps)
    bn_bias = beta - run_mean * bn_scale
    # TODO(synk): training-mode BatchNorm (batch statistics + running-stat updates)
    # is not implemented; inference-mode BN is folded into the weights/bias.

    out = convbnrelu_pallas(x, conv_w, bn_scale, bn_bias, k=K, pad=1)
    out = jax.block_until_ready(out)

    ref = _reference(x, conv_w, bn_scale, bn_bias)
    assert out.shape == (N, Cout, H, W)
    assert jnp.allclose(out, ref, atol=1e-4, rtol=1e-4)

    print("KERNEL_OK")
</pallas_src>

<mosaic_0001>
module attributes {stable_mosaic.version = 11 : i64} {
  func.func @_convbnrelu_kernel(%arg0: i32, %arg1: memref<1x18x72xf32, #tpu.memory_space<vmem>>, %arg2: memref<3x72x128xf32, #tpu.memory_space<vmem>>, %arg3: memref<1x128xf32, #tpu.memory_space<vmem>>, %arg4: memref<1x16x128xf32, #tpu.memory_space<vmem>>) attributes {dimension_semantics = [#tpu.dimension_semantics<parallel>], iteration_bounds = array<i64: 2>, scalar_prefetch = 0 : i64, scratch_operands = 0 : i64, tpu.core_type = #tpu.core_type<tc>, window_params = [{transform_indices = @transform_0, window_bounds = array<i64: 1, 18, 72>}, {pipeline_mode = #tpu.pipeline_mode<synchronous>, transform_indices = @transform_1, window_bounds = array<i64: 3, 72, 128>}, {pipeline_mode = #tpu.pipeline_mode<synchronous>, transform_indices = @transform_2, window_bounds = array<i64: 1, 128>}, {transform_indices = @transform_3, window_bounds = array<i64: 1, 16, 128>}]} {
    %cst = arith.constant 0.000000e+00 : f32
    %0 = vector.broadcast %cst : f32 to vector<16x128xf32>
    %c0 = arith.constant 0 : index
    %c0_0 = arith.constant 0 : index
    %c0_1 = arith.constant 0 : index
    %1 = vector.load %arg1[%c0, %c0_0, %c0_1] : memref<1x18x72xf32, #tpu.memory_space<vmem>>, vector<1x16x72xf32>
    %2 = vector.shape_cast %1 : vector<1x16x72xf32> to vector<16x72xf32>
    %c0_2 = arith.constant 0 : index
    %c0_3 = arith.constant 0 : index
    %c0_4 = arith.constant 0 : index
    %3 = vector.load %arg2[%c0_2, %c0_3, %c0_4] : memref<3x72x128xf32, #tpu.memory_space<vmem>>, vector<1x72x128xf32>
    %4 = vector.shape_cast %3 : vector<1x72x128xf32> to vector<72x128xf32>
    %cst_5 = arith.constant dense<0.000000e+00> : vector<16x128xf32>
    %5 = tpu.matmul %2, %4, %cst_5 {dimension_numbers = #tpu.dot_dimension_numbers<[1], [0], [0], [1], [0, 0, 1, 1], [], []>} : vector<16x72xf32>, vector<72x128xf32>, vector<16x128xf32> -> vector<16x128xf32>
    %6 = arith.addf %0, %5 : vector<16x128xf32>
    %c0_6 = arith.constant 0 : index
    %c1 = arith.constant 1 : index
    %c0_7 = arith.constant 0 : index
    %7 = vector.load %arg1[%c0_6, %c1, %c0_7] : memref<1x18x72xf32, #tpu.memory_space<vmem>>, vector<1x16x72xf32>
    %8 = vector.shape_cast %7 : vector<1x16x72xf32> to vector<16x72xf32>
    %c1_8 = arith.constant 1 : index
    %c0_9 = arith.constant 0 : index
    %c0_10 = arith.constant 0 : index
    %9 = vector.load %arg2[%c1_8, %c0_9, %c0_10] : memref<3x72x128xf32, #tpu.memory_space<vmem>>, vector<1x72x128xf32>
    %10 = vector.shape_cast %9 : vector<1x72x128xf32> to vector<72x128xf32>
    %cst_11 = arith.constant dense<0.000000e+00> : vector<16x128xf32>
    %11 = tpu.matmul %8, %10, %cst_11 {dimension_numbers = #tpu.dot_dimension_numbers<[1], [0], [0], [1], [0, 0, 1, 1], [], []>} : vector<16x72xf32>, vector<72x128xf32>, vector<16x128xf32> -> vector<16x128xf32>
    %12 = arith.addf %6, %11 : vector<16x128xf32>
    %c0_12 = arith.constant 0 : index
    %c2 = arith.constant 2 : index
    %c0_13 = arith.constant 0 : index
    %13 = vector.load %arg1[%c0_12, %c2, %c0_13] : memref<1x18x72xf32, #tpu.memory_space<vmem>>, vector<1x16x72xf32>
    %14 = vector.shape_cast %13 : vector<1x16x72xf32> to vector<16x72xf32>
    %c2_14 = arith.constant 2 : index
    %c0_15 = arith.constant 0 : index
    %c0_16 = arith.constant 0 : index
    %15 = vector.load %arg2[%c2_14, %c0_15, %c0_16] : memref<3x72x128xf32, #tpu.memory_space<vmem>>, vector<1x72x128xf32>
    %16 = vector.shape_cast %15 : vector<1x72x128xf32> to vector<72x128xf32>
    %cst_17 = arith.constant dense<0.000000e+00> : vector<16x128xf32>
    %17 = tpu.matmul %14, %16, %cst_17 {dimension_numbers = #tpu.dot_dimension_numbers<[1], [0], [0], [1], [0, 0, 1, 1], [], []>} : vector<16x72xf32>, vector<72x128xf32>, vector<16x128xf32> -> vector<16x128xf32>
    %18 = arith.addf %12, %17 : vector<16x128xf32>
    %c0_18 = arith.constant 0 : index
    %c0_19 = arith.constant 0 : index
    %19 = vector.load %arg3[%c0_18, %c0_19] : memref<1x128xf32, #tpu.memory_space<vmem>>, vector<1x128xf32>
    %20 = vector.broadcast %19 : vector<1x128xf32> to vector<16x128xf32>
    %21 = arith.addf %18, %20 : vector<16x128xf32>
    %cst_20 = arith.constant 0.000000e+00 : f32
    %22 = vector.broadcast %cst_20 : f32 to vector<16x128xf32>
    %23 = arith.maximumf %21, %22 : vector<16x128xf32>
    %24 = vector.shape_cast %23 : vector<16x128xf32> to vector<1x16x128xf32>
    %c0_21 = arith.constant 0 : index
    %c0_22 = arith.constant 0 : index
    %c0_23 = arith.constant 0 : index
    %25 = vector.load %arg4[%c0_21, %c0_22, %c0_23] : memref<1x16x128xf32, #tpu.memory_space<vmem>>, vector<1x16x128xf32>
    tpu.vector_store %arg4[%c0_21, %c0_22, %c0_23], %24 {strides = array<i32>} : memref<1x16x128xf32, #tpu.memory_space<vmem>>, vector<1x16x128xf32>,
    return
  }
  func.func @transform_0(%arg0: i32) -> (i32, i32, i32) {
    %c0_i32 = arith.constant 0 : i32
    %c0_i32_0 = arith.constant 0 : i32
    %c0_i32_1 = arith.constant 0 : i32
    return %arg0, %c0_i32, %c0_i32_0 : i32, i32, i32
  }
  func.func @transform_1(%arg0: i32) -> (i32, i32, i32) {
    %c0_i32 = arith.constant 0 : i32
    %c0_i32_0 = arith.constant 0 : i32
    %c0_i32_1 = arith.constant 0 : i32
    %c0_i32_2 = arith.constant 0 : i32
    return %c0_i32, %c0_i32_0, %c0_i32_1 : i32, i32, i32
  }
  func.func @transform_2(%arg0: i32) -> (i32, i32) {
    %c0_i32 = arith.constant 0 : i32
    %c0_i32_0 = arith.constant 0 : i32
    %c0_i32_1 = arith.constant 0 : i32
    return %c0_i32, %c0_i32_0 : i32, i32
  }
  func.func @transform_3(%arg0: i32) -> (i32, i32, i32) {
    %c0_i32 = arith.constant 0 : i32
    %c0_i32_0 = arith.constant 0 : i32
    %c0_i32_1 = arith.constant 0 : i32
    return %arg0, %c0_i32, %c0_i32_0 : i32, i32, i32
  }
}

</mosaic_0001>

<llo_original>
// kernel: tile.8
$region0: #{tile.8}
  #allocation0 [shape = 's32[1]{0}', space=sflag, size = 0x4, scoped, tag = 'scoped memory for tile.8']
  %s0 = inlined_call_operand.vmem [shape: f32[8], index: 0, kind: input, shape index: {}]
  %s1 = inlined_call_operand.vmem [shape: f32[16,8], index: 1, kind: output, shape index: {}]
  // Predicated region
  $region2: #{tile.8} parent=0 // pred_check
    _
  $region3: #{tile.8} parent=0 // pred_check_branch
    %3 = sbr.rel (0) target = $region5
  $region4: #{tile.8} parent=0 // pred_region
    _
  $region5: #{tile.8} parent=0 // pred_fallthru
    _
  %v4 = vld [vmem:[%s0] ss:$0 sm:$0xff]
  %5 = vst [vmem:[%s1] sm:$0xff] %v4
  %s6 = scalar_lea.vmem %s1, 8
  %7 = vst [vmem:[%s6] sm:$0xff] %v4

// kernel: tile.9
$region0: #{tile.9}
  %s0 = inlined_call_operand.vmem [shape: f32[16,8], index: 0, kind: input, shape index: {}]
  %s1 = inlined_call_operand.vmem [shape: f32[1,128], index: 1, kind: output, shape index: {}]
  $region1: #{tile.9} parent=0
    #allocation0 [shape = 'u8[4096]{0}', space=vmem, size = 0x1000, scoped, tag = 'scoped mem for output reshape']
    %v2 = vld [vmem:[%s0] sm:$0x1]
    %vm3 = vcmask 64512
    %4 = vst.msk [vmem:[#allocation0] sm:$0x1] %vm3, %v2
    %s5 = scalar_lea.vmem %s0, 15
    %v6 = vld [vmem:[%s5] sm:$0x1]
    %7 = vrot.lane.b32.xlu0 %v6, 120
    %v8 = vpop.permute.xlu0 %7
    %vm9 = vcmask 1048512
    %10 = vst.msk [vmem:[#allocation0] sm:$0x1] %vm9, %v8
    %s11 = scalar_lea.vmem %s0, 14
    %v12 = vld [vmem:[%s11] sm:$0x1]
    %13 = vrot.lane.b32.xlu0 %v12, 112
    %v14 = vpop.permute.xlu0 %13
    %vm15 = vcmask 982912
    %16 = vst.msk [vmem:[#allocation0] sm:$0x1] %vm15, %v14
    %s17 = scalar_lea.vmem %s0, 13
    %v18 = vld [vmem:[%s17] sm:$0x1]
    %19 = vrot.lane.b32.xlu0 %v18, 104
    %v20 = vpop.permute.xlu0 %19
    %vm21 = vcmask 917312
    %22 = vst.msk [vmem:[#allocation0] sm:$0x1] %vm21, %v20
    %s23 = scalar_lea.vmem %s0, 12
    %v24 = vld [vmem:[%s23] sm:$0x1]
    %25 = vrot.lane.b32.xlu0 %v24, 96
    %v26 = vpop.permute.xlu0 %25
    %vm27 = vcmask 851712
    %28 = vst.msk [vmem:[#allocation0] sm:$0x1] %vm27, %v26
    %s29 = scalar_lea.vmem %s0, 11
    %v30 = vld [vmem:[%s29] sm:$0x1]
    %31 = vrot.lane.b32.xlu0 %v30, 88
    %v32 = vpop.permute.xlu0 %31
    %vm33 = vcmask 786112
    %34 = vst.msk [vmem:[#allocation0] sm:$0x1] %vm33, %v32
    %s35 = scalar_lea.vmem %s0, 10
    %v36 = vld [vmem:[%s35] sm:$0x1]
    %37 = vrot.lane.b32.xlu0 %v36, 80
    %v38 = vpop.permute.xlu0 %37
    %vm39 = vcmask 720512
    %40 = vst.msk [vmem:[#allocation0] sm:$0x1] %vm39, %v38
    %s41 = scalar_lea.vmem %s0, 9
    %v42 = vld [vmem:[%s41] sm:$0x1]
    %43 = vrot.lane.b32.xlu0 %v42, 72
    %v44 = vpop.permute.xlu0 %43
    %vm45 = vcmask 654912
    %46 = vst.msk [vmem:[#allocation0] sm:$0x1] %vm45, %v44
    %s47 = scalar_lea.vmem %s0, 8
    %v48 = vld [vmem:[%s47] sm:$0x1]
    %49 = vrot.lane.b32.xlu0 %v48, 64
    %v50 = vpop.permute.xlu0 %49
    %vm51 = vcmask 589312
    %52 = vst.msk [vmem:[#allocation0] sm:$0x1] %vm51, %v50
    %s53 = scalar_lea.vmem %s0, 7
    %v54 = vld [vmem:[%s53] sm:$0x1]
    %55 = vrot.lane.b32.xlu0 %v54, 56
    %v56 = vpop.permute.xlu0 %55
    %vm57 = vcmask 523712
    %58 = vst.msk [vmem:[#allocation0] sm:$0x1] %vm57, %v56
    %s59 = scalar_lea.vmem %s0, 6
    %v60 = vld [vmem:[%s59] sm:$0x1]
    %61 = vrot.lane.b32.xlu0 %v60, 48
    %v62 = vpop.permute.xlu0 %61
    %vm63 = vcmask 458112
    %64 = vst.msk [vmem:[#allocation0] sm:$0x1] %vm63, %v62
    %s65 = scalar_lea.vmem %s0, 5
    %v66 = vld [vmem:[%s65] sm:$0x1]
    %67 = vrot.lane.b32.xlu0 %v66, 40
    %v68 = vpop.permute.xlu0 %67
    %vm69 = vcmask 392512
    %70 = vst.msk [vmem:[#allocation0] sm:$0x1] %vm69, %v68
    %s71 = scalar_lea.vmem %s0, 4
    %v72 = vld [vmem:[%s71] sm:$0x1]
    %73 = vrot.lane.b32.xlu0 %v72, 32
    %v74 = vpop.permute.xlu0 %73
    %vm75 = vcmask 326912
    %76 = vst.msk [vmem:[#allocation0] sm:$0x1] %vm75, %v74
    %s77 = scalar_lea.vmem %s0, 3
    %v78 = vld [vmem:[%s77] sm:$0x1]
    %79 = vrot.lane.b32.xlu0 %v78, 24
    %v80 = vpop.permute.xlu0 %79
    %vm81 = vcmask 261312
    %82 = vst.msk [vmem:[#allocation0] sm:$0x1] %vm81, %v80
    %s83 = scalar_lea.vmem %s0, 2
    %v84 = vld [vmem:[%s83] sm:$0x1]
    %85 = vrot.lane.b32.xlu0 %v84, 16
    %v86 = vpop.permute.xlu0 %85
    %vm87 = vcmask 195712
    %88 = vst.msk [vmem:[#allocation0] sm:$0x1] %vm87, %v86
    %s89 = scalar_lea.vmem %s0, 1
    %v90 = vld [vmem:[%s89] sm:$0x1]
    %91 = vrot.lane.b32.xlu0 %v90, 8
    %v92 = vpop.permute.xlu0 %91
    %vm93 = vcmask 130112
    %94 = vst.msk [vmem:[#allocation0] sm:$0x1] %vm93, %v92
    %s96 = sshll.u32 1, 1
    %s97 = ssub.s32 %s96, 1
    %v99 = vld [vmem:[#allocation0] sm:%s97]
    %s100 = sshll.u32 1, 1
    %s101 = ssub.s32 %s100, 1
    %102 = vst [vmem:[%s1] sm:%s101] %v99

// kernel: convbnrelu_pallas.1
$region0: #{convbnrelu_pallas.1}
  #allocation0 [shape = 'u32[]', space=smem, size = 0x4, offset = 0x4, fixed_abs, tag = 'smem constant byte address 0x4 - core index']
  #allocation1 [shape = 'u32[144,128]{1,0:T(1,128)}', space=vmem, size = 0x12000, scoped, tag = 'internal scratch']
  %s0 = inlined_call_operand.vmem [shape: f32[2,18,72], index: 0, kind: input, shape index: {}]
  %s1 = inlined_call_operand.vmem [shape: f32[3,72,128], index: 1, kind: input, shape index: {}]
  %s2 = inlined_call_operand.vmem [shape: f32[1,128], index: 2, kind: input, shape index: {}]
  %s3 = inlined_call_operand.vmem [shape: f32[2,16,128], index: 3, kind: output, shape index: {}]
  %s4 = sld [smem:[#allocation0]]
  $region45: #{convbnrelu_pallas.1} parent=0
    _
  %s6 = ssub.s32 1, %s4
  %s7 = scalar_select 0, %s6, %s4
  loop: start=0, step=1, limit=4
  $region2: #{convbnrelu_pallas.1} parent=0 // loop_pre_header
    _
  $region3: #{convbnrelu_pallas.1} parent=0 // loop_header
    %s9 = sphi 0, %s13
    %p10 = scmp.ge.s32.totalorder %s9, 4
    %s19 = sphi 0, %s21
    %s22 = sphi 0, %s19
    %s23 = sphi 0, %s22
    %s39 = sphi 0, %s23
    %s43 = sphi 0, %s43
    %s45 = sphi 0, %s43
    %s46 = sphi 0, %s45
    %s60 = sphi 0, %s46
    %s64 = sphi 0, %s64
    %s66 = sphi 0, %s64
    %s67 = sphi 0, %s66
    %s81 = sphi 0, %s67
    %s87 = sphi 0, %s89
    %s90 = sphi 0, %s87
    %s91 = sphi 0, %s90
    %s107 = sphi 0, %s91
  $region4: #{convbnrelu_pallas.1} parent=0 // loop_header_branch
    %12 = sbr.rel (%p10) target = $region8
  $region5: #{convbnrelu_pallas.1} parent=0 // loop_body
    %s14 = ssub.s32 %s9, 1
    %s15 = ssub.s32 %s9, 2
    %s16 = sadd.s32 %s9, 1
    %s17 = ssub.s32 %s9, %s16
    %p18 = scmp.eq.s32.totalorder %s17, 0
    %s20 = sadd.s32 %s19, 1
    %s21 = scalar_select %p18, %s19, %s20
    %p24 = pneg %p18
    %p25 = scmp.eq.s32.totalorder %s9, 1
    %p26 = por %p24, %p25
    %p27 = scmp.ne.s32.totalorder %s19, %s22
    %p28 = scmp.eq.s32.totalorder %s9, 0
    %p29 = por %p27, %p28
    %p30 = scmp.ne.s32.totalorder %s19, %s22
    %p31 = scmp.eq.s32.totalorder %s14, 1
    %p32 = por %p30, %p31
    %p33 = scmp.ne.s32.totalorder %s22, %s23
    %p34 = scmp.eq.s32.totalorder %s14, 0
    %p35 = por %p33, %p34
    %p36 = scmp.ne.s32.totalorder %s22, %s23
    %p37 = scmp.eq.s32.totalorder %s15, 1
    %p38 = por %p36, %p37
    %p40 = scmp.ne.s32.totalorder %s23, %s39
    %p41 = scmp.eq.s32.totalorder %s15, 0
    %p42 = por %p40, %p41
    %s44 = sadd.s32 %s43, 1
    %p47 = scmp.eq.s32.totalorder %s9, 1
    %p48 = scmp.ne.s32.totalorder %s43, %s45
    %p49 = scmp.eq.s32.totalorder %s9, 0
    %p50 = por %p48, %p49
    %p51 = scmp.ne.s32.totalorder %s43, %s45
    %p52 = scmp.eq.s32.totalorder %s14, 1
    %p53 = por %p51, %p52
    %p54 = scmp.ne.s32.totalorder %s45, %s46
    %p55 = scmp.eq.s32.totalorder %s14, 0
    %p56 = por %p54, %p55
    %p57 = scmp.ne.s32.totalorder %s45, %s46
    %p58 = scmp.eq.s32.totalorder %s15, 1
    %p59 = por %p57, %p58
    %p61 = scmp.ne.s32.totalorder %s46, %s60
    %p62 = scmp.eq.s32.totalorder %s15, 0
    %p63 = por %p61, %p62
    %s65 = sadd.s32 %s64, 1
    %p68 = scmp.eq.s32.totalorder %s9, 1
    %p69 = scmp.ne.s32.totalorder %s64, %s66
    %p70 = scmp.eq.s32.totalorder %s9, 0
    %p71 = por %p69, %p70
    %p72 = scmp.ne.s32.totalorder %s64, %s66
    %p73 = scmp.eq.s32.totalorder %s14, 1
    %p74 = por %p72, %p73
    %p75 = scmp.ne.s32.totalorder %s66, %s67
    %p76 = scmp.eq.s32.totalorder %s14, 0
    %p77 = por %p75, %p76
    %p78 = scmp.ne.s32.totalorder %s66, %s67
    %p79 = scmp.eq.s32.totalorder %s15, 1
    %p80 = por %p78, %p79
    %p82 = scmp.ne.s32.totalorder %s67, %s81
    %p83 = scmp.eq.s32.totalorder %s15, 0
    %p84 = por %p82, %p83
    %s85 = ssub.s32 %s9, %s16
    %p86 = scmp.eq.s32.totalorder %s85, 0
    %s88 = sadd.s32 %s87, 1
    %s89 = scalar_select %p86, %s87, %s88
    %p92 = pneg %p86
    %p93 = scmp.eq.s32.totalorder %s9, 1
    %p94 = por %p92, %p93
    %p95 = scmp.ne.s32.totalorder %s87, %s90
    %p96 = scmp.eq.s32.totalorder %s9, 0
    %p97 = por %p95, %p96
    %p98 = scmp.ne.s32.totalorder %s87, %s90
    %p99 = scmp.eq.s32.totalorder %s14, 1
    %p100 = por %p98, %p99
    %p101 = scmp.ne.s32.totalorder %s90, %s91
    %p102 = scmp.eq.s32.totalorder %s14, 0
    %p103 = por %p101, %p102
    %p104 = scmp.ne.s32.totalorder %s90, %s91
    %p105 = scmp.eq.s32.totalorder %s15, 1
    %p106 = por %p104, %p105
    %p108 = scmp.ne.s32.totalorder %s91, %s107
    %p109 = scmp.eq.s32.totalorder %s15, 0
    %p110 = por %p108, %p109
    %p111 = scmp.le.s32.totalorder 1, %s9
    %p112 = scmp.lt.s32.totalorder %s9, 3
    %p113 = pnand %p111, %p112
    %p114 = pneg %p113
    // Predicated region
    $region9: #{convbnrelu_pallas.1} parent=5 // pred_check
      _
    $region10: #{convbnrelu_pallas.1} parent=5 // pred_check_branch
      %116 = sbr.rel (%p113) target = $region12
    $region11: #{convbnrelu_pallas.1} parent=5 // pred_region
      %s117 = ssub.s32 %s9, 1
      // Predicated region
      $region13: #{convbnrelu_pallas.1} parent=11 // pred_check
        %p118 = pneg %p56
      $region14: #{convbnrelu_pallas.1} parent=11 // pred_check_branch
        %120 = sbr.rel (%p118) target = $region16
      $region15: #{convbnrelu_pallas.1} parent=11 // pred_region
        _
      $region16: #{convbnrelu_pallas.1} parent=11 // pred_fallthru
        _
      // Predicated region
      $region17: #{convbnrelu_pallas.1} parent=11 // pred_check
        %p121 = pneg %p77
      $region18: #{convbnrelu_pallas.1} parent=11 // pred_check_branch
        %123 = sbr.rel (%p121) target = $region20
      $region19: #{convbnrelu_pallas.1} parent=11 // pred_region
        _
      $region20: #{convbnrelu_pallas.1} parent=11 // pred_fallthru
        _
    $region12: #{convbnrelu_pallas.1} parent=5 // pred_fallthru
      _
    %p124 = scmp.lt.s32.totalorder %s9, 2
    // Predicated region
    $region21: #{convbnrelu_pallas.1} parent=5 // pred_check
      %p125 = pneg %p124
    $region22: #{convbnrelu_pallas.1} parent=5 // pred_check_branch
      %127 = sbr.rel (%p125) target = $region24
    $region23: #{convbnrelu_pallas.1} parent=5 // pred_region
      // Predicated region
      $region25: #{convbnrelu_pallas.1} parent=23 // pred_check
        %p128 = pneg %p29
      $region26: #{convbnrelu_pallas.1} parent=23 // pred_check_branch
        %130 = sbr.rel (%p128) target = $region28
      $region27: #{convbnrelu_pallas.1} parent=23 // pred_region
        %p131 = scmp.lt.s32.totalorder %s9, 1
        %s132 = scalar_select %p131, %s9, 1
        %s133 = smul.addr %s132, 3
        %s134 = smul.addr %s133, 8
        %s135 = scalar_lea.vmem %s0, %s134
      $region28: #{convbnrelu_pallas.1} parent=23 // pred_fallthru
        _
    $region24: #{convbnrelu_pallas.1} parent=5 // pred_fallthru
      _
    %p136 = scmp.le.s32.totalorder 1, %s9
    %p137 = scmp.lt.s32.totalorder %s9, 3
    %p138 = pnand %p136, %p137
    %p139 = pneg %p138
    // Predicated region
    $region29: #{convbnrelu_pallas.1} parent=5 // pred_check
      _
    $region30: #{convbnrelu_pallas.1} parent=5 // pred_check_branch
      %141 = sbr.rel (%p138) target = $region32
    $region31: #{convbnrelu_pallas.1} parent=5 // pred_region
      %s142 = ssub.s32 %s9, 1
      %p143 = scmp.lt.s32.totalorder %s14, 1
      %s144 = scalar_select %p143, %s14, 1
      %s145 = smul.addr %s144, 3
      %s146 = smul.addr %s145, 8
      %s147 = scalar_lea.vmem %s0, %s146
      %p148 = pneg %p35
      %p149 = pneg %p32
      %p150 = pneg %p56
      %p151 = pneg %p53
      %p152 = pneg %p77
      %p153 = pneg %p74
      %p154 = pneg %p103
      %p155 = pneg %p100
      %p156 = scmp.lt.s32.totalorder %s14, 1
      %s157 = scalar_select %p156, %s14, 1
      %s158 = smul.addr %s157, 2
      %s159 = smul.addr %s158, 8
      %s160 = scalar_lea.vmem %s3, %s159
      %p161 = scmp.lt.s32.totalorder %s14, 1
      %s162 = scalar_select %p161, %s14, 1
      %s163 = smul.addr %s162, 3
      %s164 = smul.addr %s163, 8
      %s165 = scalar_lea.vmem %s0, %s164
      %p166 = scmp.lt.s32.totalorder %s14, 1
      %s167 = scalar_select %p166, %s14, 1
      %s168 = smul.addr %s167, 2
      %s169 = smul.addr %s168, 8
      %s170 = scalar_lea.vmem %s3, %s169
      %v171 = vld [vmem:[%s165] sm:$0xff]
      %v172 = vld [vmem:[%s165 + $0x8] sm:$0xff]
      %v173 = vld [vmem:[%s1] sm:$0xff]
      %v174 = vld [vmem:[%s1 + $0x8] sm:$0xff]
      %v175 = vld [vmem:[%s1 + $0x10] sm:$0xff]
      %v176 = vld [vmem:[%s1 + $0x18] sm:$0xff]
      %v177 = vld [vmem:[%s1 + $0x20] sm:$0xff]
      %v178 = vld [vmem:[%s1 + $0x28] sm:$0xff]
      %v179 = vld [vmem:[%s1 + $0x30] sm:$0xff]
      %v180 = vld [vmem:[%s1 + $0x38] sm:$0xff]
      %v181 = vld [vmem:[%s1 + $0x40] sm:$0xff]
      %v182 = vld [vmem:[%s165 + $0x1] sm:$0xff]
      %v183 = vld [vmem:[%s165 + $0x9] sm:$0xff]
      %s184 = scalar_lea.vmem %s1, 72
      %v185 = vld [vmem:[%s184] sm:$0xff]
      %v186 = vld [vmem:[%s184 + $0x8] sm:$0xff]
      %v187 = vld [vmem:[%s184 + $0x10] sm:$0xff]
      %v188 = vld [vmem:[%s184 + $0x18] sm:$0xff]
      %v189 = vld [vmem:[%s184 + $0x20] sm:$0xff]
      %v190 = vld [vmem:[%s184 + $0x28] sm:$0xff]
      %v191 = vld [vmem:[%s184 + $0x30] sm:$0xff]
      %v192 = vld [vmem:[%s184 + $0x38] sm:$0xff]
      %v193 = vld [vmem:[%s184 + $0x40] sm:$0xff]
      %vm194 = vcmask 588800
      %v196 = vsel %vm194, %v182, 0
      %v199 = vsel %vm194, %v183, 0
      %201 = vmatprep.subr.mxu0 0.0
      %202 = vmatpush1.msra.mxu0 0.0
      %203 = vmatprep.subr.mxu0 0.0
      %204 = vmatpush1.msra.mxu0 0.0
      %205 = vmatprep.subr.mxu0 0.0
      %206 = vmatpush1.msra.mxu0 0.0
      %207 = vmatprep.subr.mxu0 0.0
      %208 = vmatpush1.msra.mxu0 0.0
      %209 = vmatprep.subr.mxu0 0.0
      %210 = vmatpush1.msra.mxu0 0.0
      %211 = vmatprep.subr.mxu0 0.0
      %212 = vmatpush1.msra.mxu0 0.0
      %213 = vmatprep.subr.mxu0 0.0
      %214 = vmatpush1.msra.mxu0 0.0
      %215 = vmatprep.subr.mxu0 0.0
      %216 = vmatpush1.msra.mxu0 %v193
      %217 = vmatprep.subr.mxu0 0.0
      %218 = vmatpush1.msra.mxu0 %v192
      %219 = vmatprep.subr.mxu0 0.0
      %220 = vmatpush1.msra.mxu0 %v191
      %221 = vmatprep.subr.mxu0 0.0
      %222 = vmatpush1.msra.mxu0 %v190
      %223 = vmatprep.subr.mxu0 0.0
      %224 = vmatpush1.msra.mxu0 %v189
      %225 = vmatprep.subr.mxu0 0.0
      %226 = vmatpush1.msra.mxu0 %v188
      %227 = vmatprep.subr.mxu0 0.0
      %228 = vmatpush1.msra.mxu0 %v187
      %229 = vmatprep.subr.mxu0 0.0
      %230 = vmatpush1.msra.mxu0 %v186
      %231 = vmatprep.subr.mxu0 0.0
      %232 = vmatpush1.msra.mxu0 %v185
      %233 = vmatprep.subr.mxu0 0.0
      %234 = vmatpush2.msra.mxu0 0.0
      %235 = vmatprep.subr.mxu0 0.0
      %236 = vmatpush2.msra.mxu0 0.0
      %237 = vmatprep.subr.mxu0 0.0
      %238 = vmatpush2.msra.mxu0 0.0
      %239 = vmatprep.subr.mxu0 0.0
      %240 = vmatpush2.msra.mxu0 0.0
      %241 = vmatprep.subr.mxu0 0.0
      %242 = vmatpush2.msra.mxu0 0.0
      %243 = vmatprep.subr.mxu0 0.0
      %244 = vmatpush2.msra.mxu0 0.0
      %245 = vmatprep.subr.mxu0 0.0
      %246 = vmatpush2.msra.mxu0 0.0
      %247 = vmatprep.subr.mxu0 0.0
      %248 = vmatpush2.msra.mxu0 0.0
      %249 = vmatprep.subr.mxu0 0.0
      %250 = vmatpush2.msra.mxu0 0.0
      %251 = vmatprep.subr.mxu0 0.0
      %252 = vmatpush2.msra.mxu0 0.0
      %253 = vmatprep.subr.mxu0 0.0
      %254 = vmatpush2.msra.mxu0 0.0
      %255 = vmatprep.subr.mxu0 0.0
      %256 = vmatpush2.msra.mxu0 0.0
      %257 = vmatprep.subr.mxu0 0.0
      %258 = vmatpush2.msra.mxu0 0.0
      %259 = vmatprep.subr.mxu0 0.0
      %260 = vmatpush2.msra.mxu0 0.0
      %261 = vmatprep.subr.mxu0 0.0
      %262 = vmatpush2.msra.mxu0 0.0
      %263 = vmatprep.subr.mxu0 0.0
      %264 = vmatpush2.msra.mxu0 0.0
      %265 = vmatprep.mubr.f32.mxu0 0.0
      %266 = vmatmul.mubr.f32.gmra.mxu0 %v196
      %v267 = vpop.f32.mrf.mxu0
      %v268 = vadd.f32 0.0, %v267
      %v269 = vpop.f32.mrf.mxu0
      %270 = vmatprep.mubr.f32.mxu0 0.0
      %271 = vmatmul.mubr.f32.gmra.mxu0 %v199
      %v272 = vpop.f32.mrf.mxu0
      %v273 = vadd.f32 0.0, %v272
      %v274 = vpop.f32.mrf.mxu0
      %275 = vdwg.mxu0
      %v277 = vsel %vm194, %v171, 0
      %v280 = vsel %vm194, %v172, 0
      %282 = vmatprep.subr.mxu0 0.0
      %283 = vmatpush1.msra.mxu0 0.0
      %284 = vmatprep.subr.mxu0 0.0
      %285 = vmatpush1.msra.mxu0 0.0
      %286 = vmatprep.subr.mxu0 0.0
      %287 = vmatpush1.msra.mxu0 0.0
      %288 = vmatprep.subr.mxu0 0.0
      %289 = vmatpush1.msra.mxu0 0.0
      %290 = vmatprep.subr.mxu0 0.0
      %291 = vmatpush1.msra.mxu0 0.0
      %292 = vmatprep.subr.mxu0 0.0
      %293 = vmatpush1.msra.mxu0 0.0
      %294 = vmatprep.subr.mxu0 0.0
      %295 = vmatpush1.msra.mxu0 0.0
      %296 = vmatprep.subr.mxu0 0.0
      %297 = vmatpush1.msra.mxu0 %v181
      %298 = vmatprep.subr.mxu0 0.0
      %299 = vmatpush1.msra.mxu0 %v180
      %300 = vmatprep.subr.mxu0 0.0
      %301 = vmatpush1.msra.mxu0 %v179
      %302 = vmatprep.subr.mxu0 0.0
      %303 = vmatpush1.msra.mxu0 %v178
      %304 = vmatprep.subr.mxu0 0.0
      %305 = vmatpush1.msra.mxu0 %v177
      %306 = vmatprep.subr.mxu0 0.0
      %307 = vmatpush1.msra.mxu0 %v176
      %308 = vmatprep.subr.mxu0 0.0
      %309 = vmatpush1.msra.mxu0 %v175
      %310 = vmatprep.subr.mxu0 0.0
      %311 = vmatpush1.msra.mxu0 %v174
      %312 = vmatprep.subr.mxu0 0.0
      %313 = vmatpush1.msra.mxu0 %v173
      %314 = vmatprep.subr.mxu0 0.0
      %315 = vmatpush2.msra.mxu0 0.0
      %316 = vmatprep.subr.mxu0 0.0
      %317 = vmatpush2.msra.mxu0 0.0
      %318 = vmatprep.subr.mxu0 0.0
      %319 = vmatpush2.msra.mxu0 0.0
      %320 = vmatprep.subr.mxu0 0.0
      %321 = vmatpush2.msra.mxu0 0.0
      %322 = vmatprep.subr.mxu0 0.0
      %323 = vmatpush2.msra.mxu0 0.0
      %324 = vmatprep.subr.mxu0 0.0
      %325 = vmatpush2.msra.mxu0 0.0
      %326 = vmatprep.subr.mxu0 0.0
      %327 = vmatpush2.msra.mxu0 0.0
      %328 = vmatprep.subr.mxu0 0.0
      %329 = vmatpush2.msra.mxu0 0.0
      %330 = vmatprep.subr.mxu0 0.0
      %331 = vmatpush2.msra.mxu0 0.0
      %332 = vmatprep.subr.mxu0 0.0
      %333 = vmatpush2.msra.mxu0 0.0
      %334 = vmatprep.subr.mxu0 0.0
      %335 = vmatpush2.msra.mxu0 0.0
      %336 = vmatprep.subr.mxu0 0.0
      %337 = vmatpush2.msra.mxu0 0.0
      %338 = vmatprep.subr.mxu0 0.0
      %339 = vmatpush2.msra.mxu0 0.0
      %340 = vmatprep.subr.mxu0 0.0
      %341 = vmatpush2.msra.mxu0 0.0
      %342 = vmatprep.subr.mxu0 0.0
      %343 = vmatpush2.msra.mxu0 0.0
      %344 = vmatprep.subr.mxu0 0.0
      %345 = vmatpush2.msra.mxu0 0.0
      %346 = vmatprep.mubr.f32.mxu0 0.0
      %347 = vmatmul.mubr.f32.gmra.mxu0 %v277
      %v348 = vpop.f32.mrf.mxu0
      %v349 = vadd.f32 %v268, %v348
      %v350 = vpop.f32.mrf.mxu0
      %351 = vmatprep.mubr.f32.mxu0 0.0
      %352 = vmatmul.mubr.f32.gmra.mxu0 %v280
      %v353 = vpop.f32.mrf.mxu0
      %v354 = vadd.f32 %v273, %v353
      %v355 = vpop.f32.mrf.mxu0
      %356 = vdwg.mxu0
      %v357 = vld [vmem:[%s165 + $0x2] sm:$0xff]
      %v358 = vld [vmem:[%s165 + $0xa] sm:$0xff]
      %s359 = scalar_lea.vmem %s1, 144
      %v360 = vld [vmem:[%s359] sm:$0xff]
      %v361 = vld [vmem:[%s359 + $0x8] sm:$0xff]
      %v362 = vld [vmem:[%s359 + $0x10] sm:$0xff]
      %v363 = vld [vmem:[%s359 + $0x18] sm:$0xff]
      %v364 = vld [vmem:[%s359 + $0x20] sm:$0xff]
      %v365 = vld [vmem:[%s359 + $0x28] sm:$0xff]
      %v366 = vld [vmem:[%s359 + $0x30] sm:$0xff]
      %v367 = vld [vmem:[%s359 + $0x38] sm:$0xff]
      %v368 = vld [vmem:[%s359 + $0x40] sm:$0xff]
      %v370 = vsel %vm194, %v357, 0
      %v373 = vsel %vm194, %v358, 0
      %375 = vmatprep.subr.mxu0 0.0
      %376 = vmatpush1.msra.mxu0 0.0
      %377 = vmatprep.subr.mxu0 0.0
      %378 = vmatpush1.msra.mxu0 0.0
      %379 = vmatprep.subr.mxu0 0.0
      %380 = vmatpush1.msra.mxu0 0.0
      %381 = vmatprep.subr.mxu0 0.0
      %382 = vmatpush1.msra.mxu0 0.0
      %383 = vmatprep.subr.mxu0 0.0
      %384 = vmatpush1.msra.mxu0 0.0
      %385 = vmatprep.subr.mxu0 0.0
      %386 = vmatpush1.msra.mxu0 0.0
      %387 = vmatprep.subr.mxu0 0.0
      %388 = vmatpush1.msra.mxu0 0.0
      %389 = vmatprep.subr.mxu0 0.0
      %390 = vmatpush1.msra.mxu0 %v368
      %391 = vmatprep.subr.mxu0 0.0
      %392 = vmatpush1.msra.mxu0 %v367
      %393 = vmatprep.subr.mxu0 0.0
      %394 = vmatpush1.msra.mxu0 %v366
      %395 = vmatprep.subr.mxu0 0.0
      %396 = vmatpush1.msra.mxu0 %v365
      %397 = vmatprep.subr.mxu0 0.0
      %398 = vmatpush1.msra.mxu0 %v364
      %399 = vmatprep.subr.mxu0 0.0
      %400 = vmatpush1.msra.mxu0 %v363
      %401 = vmatprep.subr.mxu0 0.0
      %402 = vmatpush1.msra.mxu0 %v362
      %403 = vmatprep.subr.mxu0 0.0
      %404 = vmatpush1.msra.mxu0 %v361
      %405 = vmatprep.subr.mxu0 0.0
      %406 = vmatpush1.msra.mxu0 %v360
      %407 = vmatprep.subr.mxu0 0.0
      %408 = vmatpush2.msra.mxu0 0.0
      %409 = vmatprep.subr.mxu0 0.0
      %410 = vmatpush2.msra.mxu0 0.0
      %411 = vmatprep.subr.mxu0 0.0
      %412 = vmatpush2.msra.mxu0 0.0
      %413 = vmatprep.subr.mxu0 0.0
      %414 = vmatpush2.msra.mxu0 0.0
      %415 = vmatprep.subr.mxu0 0.0
      %416 = vmatpush2.msra.mxu0 0.0
      %417 = vmatprep.subr.mxu0 0.0
      %418 = vmatpush2.msra.mxu0 0.0
      %419 = vmatprep.subr.mxu0 0.0
      %420 = vmatpush2.msra.mxu0 0.0
      %421 = vmatprep.subr.mxu0 0.0
      %422 = vmatpush2.msra.mxu0 0.0
      %423 = vmatprep.subr.mxu0 0.0
      %424 = vmatpush2.msra.mxu0 0.0
      %425 = vmatprep.subr.mxu0 0.0
      %426 = vmatpush2.msra.mxu0 0.0
      %427 = vmatprep.subr.mxu0 0.0
      %428 = vmatpush2.msra.mxu0 0.0
      %429 = vmatprep.subr.mxu0 0.0
      %430 = vmatpush2.msra.mxu0 0.0
      %431 = vmatprep.subr.mxu0 0.0
      %432 = vmatpush2.msra.mxu0 0.0
      %433 = vmatprep.subr.mxu0 0.0
      %434 = vmatpush2.msra.mxu0 0.0
      %435 = vmatprep.subr.mxu0 0.0
      %436 = vmatpush2.msra.mxu0 0.0
      %437 = vmatprep.subr.mxu0 0.0
      %438 = vmatpush2.msra.mxu0 0.0
      %439 = vmatprep.mubr.f32.mxu0 0.0
      %440 = vmatmul.mubr.f32.gmra.mxu0 %v370
      %v441 = vpop.f32.mrf.mxu0
      %v442 = vadd.f32 0.0, %v441
      %v443 = vpop.f32.mrf.mxu0
      %444 = vmatprep.mubr.f32.mxu0 0.0
      %445 = vmatmul.mubr.f32.gmra.mxu0 %v373
      %v446 = vpop.f32.mrf.mxu0
      %v447 = vadd.f32 0.0, %v446
      %v448 = vpop.f32.mrf.mxu0
      %449 = vdwg.mxu0
      %v450 = vadd.f32 %v349, %v442
      %v451 = vadd.f32 %v354, %v447
      %v452 = vld [vmem:[%s2] sm:$0x1]
      %v454 = vlaneseq
      %v455 = vshrl.u32 %v454, 7
      %v456 = vsub.s32 0, %v455
      %v457 = vrot.slane %v452, %v456
      %v459 = vadd.f32 %v450, %v457
      %v460 = vadd.f32 %v451, %v457
      %v461 = vmax.f32 %v459, 0.0
      %v462 = vmax.f32 %v460, 0.0
      %463 = vst [vmem:[%s170] sm:$0xff] %v461
      %464 = vst [vmem:[%s170 + $0x8] sm:$0xff] %v462
      %p465 = scmp.lt.s32.totalorder %s14, 1
      %s466 = scalar_select %p465, %s14, 1
      %s467 = smul.addr %s466, 2
      %s468 = smul.addr %s467, 8
      %s469 = scalar_lea.vmem %s3, %s468
      // Predicated region
      $region33: #{convbnrelu_pallas.1} parent=31 // pred_check
        %p470 = pneg %p100
      $region34: #{convbnrelu_pallas.1} parent=31 // pred_check_branch
        %472 = sbr.rel (%p470) target = $region36
      $region35: #{convbnrelu_pallas.1} parent=31 // pred_region
        _
      $region36: #{convbnrelu_pallas.1} parent=31 // pred_fallthru
        _
    $region32: #{convbnrelu_pallas.1} parent=5 // pred_fallthru
      _
    %p473 = scmp.le.s32.totalorder 2, %s9
    // Predicated region
    $region37: #{convbnrelu_pallas.1} parent=5 // pred_check
      %p474 = pneg %p473
    $region38: #{convbnrelu_pallas.1} parent=5 // pred_check_branch
      %476 = sbr.rel (%p474) target = $region40
    $region39: #{convbnrelu_pallas.1} parent=5 // pred_region
      %s477 = ssub.s32 %s9, 2
      // Predicated region
      $region41: #{convbnrelu_pallas.1} parent=39 // pred_check
        %p478 = pneg %p106
      $region42: #{convbnrelu_pallas.1} parent=39 // pred_check_branch
        %480 = sbr.rel (%p478) target = $region44
      $region43: #{convbnrelu_pallas.1} parent=39 // pred_region
        %p481 = scmp.lt.s32.totalorder %s15, 1
        %s482 = scalar_select %p481, %s15, 1
        %s483 = smul.addr %s482, 2
        %s484 = smul.addr %s483, 8
        %s485 = scalar_lea.vmem %s3, %s484
      $region44: #{convbnrelu_pallas.1} parent=39 // pred_fallthru
        _
    $region40: #{convbnrelu_pallas.1} parent=5 // pred_fallthru
      _
  $region6: #{convbnrelu_pallas.1} parent=0 // loop_footer
    %s13 = sadd.s32 1, %s9
  $region7: #{convbnrelu_pallas.1} parent=0 // loop_footer_branch
    %8 = sbr.rel target = $region3
  $region8: #{convbnrelu_pallas.1} parent=0 // loop_exit
    _

</llo_original>
